<compile_context>
chip_gen: v7x
topology: tpu7x:2x2x1
jax: 0.10.0
libtpu: 0.0.40
codegen_flags: <defaults>
</compile_context>

<pallas_src>
import jax
import jax.numpy as jnp
from jax.experimental import pallas as pl
from jax.experimental.pallas import tpu as pltpu


def qnetwork_kernel(st_ref, at_ref, w1s_ref, w1a_ref, b1_ref,
                    w2_ref, b2_ref, w3_ref, b3_ref, o_ref):
    """Fused 3-layer MLP in transposed layout (batch on the lane axis).

    st:(NS,TB) at:(NA,TB)  w1s:(H,NS) w1a:(H,NA) b1:(H,1)
    w2:(H,H) b2:(H,1)  w3:(H,1) b3:(1,1)   o:(1,TB)
    """
    # Layer 1 with fused concat: h1^T = relu(W1s @ s^T + W1a @ a^T + b1)
    # Both operands are already in natural MXU layout (no relayout needed).
    h1t = jnp.dot(w1s_ref[...], st_ref[...], preferred_element_type=jnp.float32)
    h1t = h1t + jnp.dot(w1a_ref[...], at_ref[...],
                        preferred_element_type=jnp.float32)
    h1t = jnp.maximum(h1t + b1_ref[...], 0.0)                      # (H, TB)

    # Layer 2: MXU matmul, batch fills the lane axis (N = tile_b).
    h2t = jnp.dot(w2_ref[...], h1t, preferred_element_type=jnp.float32)
    h2t = jnp.maximum(h2t + b2_ref[...], 0.0)                      # (H, TB)

    # Layer 3 (H -> 1): VPU multiply + cross-sublane reduce (exact f32);
    # result is already lane-dense (1, tile_b) -> unmasked stores.
    q = jnp.sum(h2t * w3_ref[...], axis=0, keepdims=True)          # (1, TB)
    o_ref[...] = q + b3_ref[...]


def _select_tile(batch, max_tile=2048):
    """Pick (tile_b, num_tiles).

    Tiny batches (<=256): one full-extent tile (latency regime; any B legal).
    Larger batches: tile_b is a multiple of 128 (lane-dense output blocks),
    scaled with B but capped at max_tile, and chosen so num_tiles >= 2 so the
    'parallel' grid axis can shard across both v7x TensorCores.
    """
    if batch <= 256:
        return batch, 1
    half = pl.cdiv(batch, 2)
    tile_b = min(max_tile, 128 * pl.cdiv(half, 128))
    return tile_b, pl.cdiv(batch, tile_b)


def qnetwork_forward(state, action, params, max_tile=2048):
    """QNetwork forward: state (B, NS), action (B, NA) -> Q (B, 1)."""
    w1s, w1a, b1, w2, b2, w3, b3 = params
    NS = w1s.shape[1]
    NA = w1a.shape[1]
    B = state.shape[0]

    # Mirrors torch FloatTensor(). No-op (no extra kernel) when already f32.
    # If inputs arrive as bf16 and bf16 streaming is preferred, skip this cast;
    # accumulation stays f32 via preferred_element_type in the kernel.
    state = state.astype(jnp.float32)
    action = action.astype(jnp.float32)

    # Feature-major (lane-dense) inputs for the kernel.
    st = state.T      # (NS, B)
    at = action.T     # (NA, B)

    tile_b, num_tiles = _select_tile(B, max_tile)
    # Layout legality: either a full-extent single tile, or 128-multiple tiles.
    assert tile_b == B or tile_b % 128 == 0

    def full(arr):
        return pl.BlockSpec(arr.shape, lambda i: (0,) * arr.ndim)

    q_lane = pl.pallas_call(
        qnetwork_kernel,
        out_shape=jax.ShapeDtypeStruct((1, B), jnp.float32),
        grid=(num_tiles,),
        in_specs=[
            pl.BlockSpec((NS, tile_b), lambda i: (0, i)),   # state^T tile
            pl.BlockSpec((NA, tile_b), lambda i: (0, i)),   # action^T tile
            full(w1s), full(w1a), full(b1),
            full(w2), full(b2), full(w3), full(b3),
        ],
        out_specs=pl.BlockSpec((1, tile_b), lambda i: (0, i)),
        compiler_params=pltpu.CompilerParams(
            dimension_semantics=("parallel",)),   # batch tiles are independent
    )(st, at, w1s, w1a, b1, w2, b2, w3, b3)

    # Keep PyTorch-shaped (B, 1) output. (If the consumer can take a lane-major
    # (1, B) / flat (B,) result, return q_lane directly and save a relayout.)
    return q_lane.reshape(B, 1)


def init_qnetwork_params(key, num_inputs, num_actions, hidden_size, init_w=0.001):
    """Deterministic init mirroring the PyTorch module's __init__.

    linear1/linear2: default nn.Linear init U(-1/sqrt(fan_in), 1/sqrt(fan_in)).
    linear3: U(-init_w, init_w) for weight and bias.
    W1 is split by input columns once here so the kernel fuses the concat.
    Biases are (H, 1) columns for the transposed in-kernel layout; w3 is an
    (H, 1) column for the VPU reduction.
    """
    d_in = num_inputs + num_actions
    k1, k2, k3, k4, k5, k6 = jax.random.split(key, 6)

    def uniform(k, shape, bound):
        return jax.random.uniform(k, shape, jnp.float32, -bound, bound)

    w1 = uniform(k1, (hidden_size, d_in), 1.0 / (d_in ** 0.5))
    b1 = uniform(k2, (hidden_size, 1), 1.0 / (d_in ** 0.5))
    w2 = uniform(k3, (hidden_size, hidden_size), 1.0 / (hidden_size ** 0.5))
    b2 = uniform(k4, (hidden_size, 1), 1.0 / (hidden_size ** 0.5))
    w3 = uniform(k5, (hidden_size, 1), init_w)
    b3 = uniform(k6, (1, 1), init_w)

    w1s, w1a = w1[:, :num_inputs], w1[:, num_inputs:]
    return (w1s, w1a, b1, w2, b2, w3, b3)


def _reference(state, action, params):
    """Pure-JAX reference (PyTorch formulation y = x @ W.T + b) at HIGHEST
    precision, i.e. true-f32 ground truth."""
    hi = jax.lax.Precision.HIGHEST
    w1s, w1a, b1, w2, b2, w3, b3 = params
    x = jnp.concatenate([state, action], axis=1)
    w1 = jnp.concatenate([w1s, w1a], axis=1)
    h1 = jnp.maximum(jnp.dot(x, w1.T, precision=hi) + b1[:, 0], 0.0)
    h2 = jnp.maximum(jnp.dot(h1, w2.T, precision=hi) + b2[:, 0], 0.0)
    return jnp.dot(h2, w3, precision=hi) + b3


if __name__ == "__main__":
    NUM_INPUTS = 8     # state dim
    NUM_ACTIONS = 4    # action dim
    HIDDEN = 32

    key = jax.random.PRNGKey(0)
    kp, ks, ka = jax.random.split(key, 3)
    params = init_qnetwork_params(kp, NUM_INPUTS, NUM_ACTIONS, HIDDEN)

    ok = True
    # (1) tiny batch -> single full-extent tile; (2) ragged batch -> 2 tiles
    # with a masked boundary tile, exercising the multi-tile / megacore path.
    for batch in (8, 300):
        state = jax.random.normal(ks, (batch, NUM_INPUTS), jnp.float32)
        action = jax.random.normal(ka, (batch, NUM_ACTIONS), jnp.float32)

        q = qnetwork_forward(state, action, params)
        q = jax.block_until_ready(q)

        q_ref = _reference(state, action, params)
        ok = ok and (q.shape == (batch, 1))
        ok = ok and bool(jnp.allclose(q, q_ref, atol=1e-3, rtol=1e-2))

    assert ok
    print("KERNEL_OK")
</pallas_src>

<mosaic_0001>
module attributes {stable_mosaic.version = 11 : i64} {
  func.func @qnetwork_kernel(%arg0: i32, %arg1: memref<8x8xf32, #tpu.memory_space<vmem>>, %arg2: memref<4x8xf32, #tpu.memory_space<vmem>>, %arg3: memref<32x8xf32, #tpu.memory_space<vmem>>, %arg4: memref<32x4xf32, #tpu.memory_space<vmem>>, %arg5: memref<32x1xf32, #tpu.memory_space<vmem>>, %arg6: memref<32x32xf32, #tpu.memory_space<vmem>>, %arg7: memref<32x1xf32, #tpu.memory_space<vmem>>, %arg8: memref<32x1xf32, #tpu.memory_space<vmem>>, %arg9: memref<1x1xf32, #tpu.memory_space<vmem>>, %arg10: memref<1x8xf32, #tpu.memory_space<vmem>>) attributes {dimension_semantics = [#tpu.dimension_semantics<parallel>], iteration_bounds = array<i64: 1>, scalar_prefetch = 0 : i64, scratch_operands = 0 : i64, tpu.core_type = #tpu.core_type<tc>, window_params = [{transform_indices = @transform_0, window_bounds = array<i64: 8, 8>}, {transform_indices = @transform_1, window_bounds = array<i64: 4, 8>}, {pipeline_mode = #tpu.pipeline_mode<synchronous>, transform_indices = @transform_2, window_bounds = array<i64: 32, 8>}, {pipeline_mode = #tpu.pipeline_mode<synchronous>, transform_indices = @transform_3, window_bounds = array<i64: 32, 4>}, {pipeline_mode = #tpu.pipeline_mode<synchronous>, transform_indices = @transform_4, window_bounds = array<i64: 32, 1>}, {pipeline_mode = #tpu.pipeline_mode<synchronous>, transform_indices = @transform_5, window_bounds = array<i64: 32, 32>}, {pipeline_mode = #tpu.pipeline_mode<synchronous>, transform_indices = @transform_6, window_bounds = array<i64: 32, 1>}, {pipeline_mode = #tpu.pipeline_mode<synchronous>, transform_indices = @transform_7, window_bounds = array<i64: 32, 1>}, {pipeline_mode = #tpu.pipeline_mode<synchronous>, transform_indices = @transform_8, window_bounds = array<i64: 1, 1>}, {transform_indices = @transform_9, window_bounds = array<i64: 1, 8>}]} {
    %c0 = arith.constant 0 : index
    %c0_0 = arith.constant 0 : index
    %0 = vector.load %arg3[%c0, %c0_0] : memref<32x8xf32, #tpu.memory_space<vmem>>, vector<32x8xf32>
    %c0_1 = arith.constant 0 : index
    %c0_2 = arith.constant 0 : index
    %1 = vector.load %arg1[%c0_1, %c0_2] : memref<8x8xf32, #tpu.memory_space<vmem>>, vector<8x8xf32>
    %cst = arith.constant dense<0.000000e+00> : vector<32x8xf32>
    %2 = tpu.matmul %0, %1, %cst {dimension_numbers = #tpu.dot_dimension_numbers<[1], [0], [0], [1], [0, 0, 1, 1], [], []>} : vector<32x8xf32>, vector<8x8xf32>, vector<32x8xf32> -> vector<32x8xf32>
    %c0_3 = arith.constant 0 : index
    %c0_4 = arith.constant 0 : index
    %3 = vector.load %arg4[%c0_3, %c0_4] : memref<32x4xf32, #tpu.memory_space<vmem>>, vector<32x4xf32>
    %c0_5 = arith.constant 0 : index
    %c0_6 = arith.constant 0 : index
    %4 = vector.load %arg2[%c0_5, %c0_6] : memref<4x8xf32, #tpu.memory_space<vmem>>, vector<4x8xf32>
    %cst_7 = arith.constant dense<0.000000e+00> : vector<32x8xf32>
    %5 = tpu.matmul %3, %4, %cst_7 {dimension_numbers = #tpu.dot_dimension_numbers<[1], [0], [0], [1], [0, 0, 1, 1], [], []>} : vector<32x4xf32>, vector<4x8xf32>, vector<32x8xf32> -> vector<32x8xf32>
    %6 = arith.addf %2, %5 : vector<32x8xf32>
    %c0_8 = arith.constant 0 : index
    %c0_9 = arith.constant 0 : index
    %7 = vector.load %arg5[%c0_8, %c0_9] : memref<32x1xf32, #tpu.memory_space<vmem>>, vector<32x1xf32>
    %8 = vector.broadcast %7 : vector<32x1xf32> to vector<32x8xf32>
    %9 = arith.addf %6, %8 : vector<32x8xf32>
    %cst_10 = arith.constant 0.000000e+00 : f32
    %10 = vector.broadcast %cst_10 : f32 to vector<32x8xf32>
    %11 = arith.maximumf %9, %10 : vector<32x8xf32>
    %c0_11 = arith.constant 0 : index
    %c0_12 = arith.constant 0 : index
    %12 = vector.load %arg6[%c0_11, %c0_12] : memref<32x32xf32, #tpu.memory_space<vmem>>, vector<32x32xf32>
    %cst_13 = arith.constant dense<0.000000e+00> : vector<32x8xf32>
    %13 = tpu.matmul %12, %11, %cst_13 {dimension_numbers = #tpu.dot_dimension_numbers<[1], [0], [0], [1], [0, 0, 1, 1], [], []>} : vector<32x32xf32>, vector<32x8xf32>, vector<32x8xf32> -> vector<32x8xf32>
    %c0_14 = arith.constant 0 : index
    %c0_15 = arith.constant 0 : index
    %14 = vector.load %arg7[%c0_14, %c0_15] : memref<32x1xf32, #tpu.memory_space<vmem>>, vector<32x1xf32>
    %15 = vector.broadcast %14 : vector<32x1xf32> to vector<32x8xf32>
    %16 = arith.addf %13, %15 : vector<32x8xf32>
    %cst_16 = arith.constant 0.000000e+00 : f32
    %17 = vector.broadcast %cst_16 : f32 to vector<32x8xf32>
    %18 = arith.maximumf %16, %17 : vector<32x8xf32>
    %c0_17 = arith.constant 0 : index
    %c0_18 = arith.constant 0 : index
    %19 = vector.load %arg8[%c0_17, %c0_18] : memref<32x1xf32, #tpu.memory_space<vmem>>, vector<32x1xf32>
    %20 = vector.broadcast %19 : vector<32x1xf32> to vector<32x8xf32>
    %21 = arith.mulf %18, %20 : vector<32x8xf32>
    %cst_19 = arith.constant dense<0.000000e+00> : vector<8xf32>
    %22 = vector.multi_reduction <add>, %21, %cst_19 [0] : vector<32x8xf32> to vector<8xf32>
    %23 = vector.shape_cast %22 : vector<8xf32> to vector<1x8xf32>
    %c0_20 = arith.constant 0 : index
    %c0_21 = arith.constant 0 : index
    %24 = vector.load %arg9[%c0_20, %c0_21] : memref<1x1xf32, #tpu.memory_space<vmem>>, vector<1x1xf32>
    %25 = vector.broadcast %24 : vector<1x1xf32> to vector<1x8xf32>
    %26 = arith.addf %23, %25 : vector<1x8xf32>
    %c0_22 = arith.constant 0 : index
    %c0_23 = arith.constant 0 : index
    %27 = vector.load %arg10[%c0_22, %c0_23] : memref<1x8xf32, #tpu.memory_space<vmem>>, vector<1x8xf32>
    tpu.vector_store %arg10[%c0_22, %c0_23], %26 {strides = array<i32>} : memref<1x8xf32, #tpu.memory_space<vmem>>, vector<1x8xf32>,
    return
  }
  func.func @transform_0(%arg0: i32) -> (i32, i32) {
    %c0_i32 = arith.constant 0 : i32
    %c0_i32_0 = arith.constant 0 : i32
    return %c0_i32, %arg0 : i32, i32
  }
  func.func @transform_1(%arg0: i32) -> (i32, i32) {
    %c0_i32 = arith.constant 0 : i32
    %c0_i32_0 = arith.constant 0 : i32
    return %c0_i32, %arg0 : i32, i32
  }
  func.func @transform_2(%arg0: i32) -> (i32, i32) {
    %c0_i32 = arith.constant 0 : i32
    %c0_i32_0 = arith.constant 0 : i32
    %c0_i32_1 = arith.constant 0 : i32
    return %c0_i32, %c0_i32_0 : i32, i32
  }
  func.func @transform_3(%arg0: i32) -> (i32, i32) {
    %c0_i32 = arith.constant 0 : i32
    %c0_i32_0 = arith.constant 0 : i32
    %c0_i32_1 = arith.constant 0 : i32
    return %c0_i32, %c0_i32_0 : i32, i32
  }
  func.func @transform_4(%arg0: i32) -> (i32, i32) {
    %c0_i32 = arith.constant 0 : i32
    %c0_i32_0 = arith.constant 0 : i32
    %c0_i32_1 = arith.constant 0 : i32
    return %c0_i32, %c0_i32_0 : i32, i32
  }
  func.func @transform_5(%arg0: i32) -> (i32, i32) {
    %c0_i32 = arith.constant 0 : i32
    %c0_i32_0 = arith.constant 0 : i32
    %c0_i32_1 = arith.constant 0 : i32
    return %c0_i32, %c0_i32_0 : i32, i32
  }
  func.func @transform_6(%arg0: i32) -> (i32, i32) {
    %c0_i32 = arith.constant 0 : i32
    %c0_i32_0 = arith.constant 0 : i32
    %c0_i32_1 = arith.constant 0 : i32
    return %c0_i32, %c0_i32_0 : i32, i32
  }
  func.func @transform_7(%arg0: i32) -> (i32, i32) {
    %c0_i32 = arith.constant 0 : i32
    %c0_i32_0 = arith.constant 0 : i32
    %c0_i32_1 = arith.constant 0 : i32
    return %c0_i32, %c0_i32_0 : i32, i32
  }
  func.func @transform_8(%arg0: i32) -> (i32, i32) {
    %c0_i32 = arith.constant 0 : i32
    %c0_i32_0 = arith.constant 0 : i32
    %c0_i32_1 = arith.constant 0 : i32
    return %c0_i32, %c0_i32_0 : i32, i32
  }
  func.func @transform_9(%arg0: i32) -> (i32, i32) {
    %c0_i32 = arith.constant 0 : i32
    %c0_i32_0 = arith.constant 0 : i32
    return %c0_i32, %arg0 : i32, i32
  }
}

</mosaic_0001>

<llo_original>
// kernel: tpu_custom_call.1
$region0: #{tpu_custom_call.1}
  #allocation0 [shape = 'u32[]', space=smem, size = 0x4, offset = 0x4, fixed_abs, tag = 'smem constant byte address 0x4 - core index']
  #allocation1 [shape = 'u32[144,128]{1,0:T(1,128)}', space=vmem, size = 0x12000, scoped, tag = 'internal scratch']
  #allocation2 [shape = 'f32[1,1]{1,0:T(1,128)S(1)}', space=vmem, size = 0x200, scoped, tag = 'scoped memory for tpu_custom_call.1']
  %s0 = inlined_call_operand.vmem [shape: f32[8,8], index: 0, kind: input, shape index: {}]
  %s1 = inlined_call_operand.vmem [shape: f32[4,8], index: 1, kind: input, shape index: {}]
  %s2 = inlined_call_operand.vmem [shape: f32[32,8], index: 2, kind: input, shape index: {}]
  %s3 = inlined_call_operand.vmem [shape: f32[32,4], index: 3, kind: input, shape index: {}]
  %s4 = inlined_call_operand.vmem [shape: f32[32,1], index: 4, kind: input, shape index: {}]
  %s5 = inlined_call_operand.vmem [shape: f32[32,32], index: 5, kind: input, shape index: {}]
  %s6 = inlined_call_operand.vmem [shape: f32[32,1], index: 6, kind: input, shape index: {}]
  %s7 = inlined_call_operand.vmem [shape: f32[32,1], index: 7, kind: input, shape index: {}]
  %s8 = inlined_call_operand.<no memory space> [shape: f32[1,1], index: 8, kind: input, shape index: {}]
  %s9 = inlined_call_operand.hbm [shape: f32[1,8], index: 9, kind: output, shape index: {}]
  %s10 = sld [smem:[#allocation0]]
  $region46: #{tpu_custom_call.1} parent=0
    _
  %s12 = ssub.s32 1, %s10
  %s13 = scalar_select 0, %s12, %s10
  %v14 = vstv %s8
  %15 = vst [vmem:[#allocation2] sm:$0x1] %v14
  $region1: #{tpu_custom_call.1} parent=0
    #allocation3 [shape = 'u8[512]{0}', space=vmem, size = 0x400, scoped, tag = 'output window, operand 0, single buffered']
    #allocation4 [shape = 's32[1]{0}', space=sflag, size = 0x4, scoped, tag = 'scoped memory for tpu_custom_call.1']
    %16 = vsyncpa [#allocation4], 0
    // Predicated region
    $region2: #{tpu_custom_call.1} parent=1 // pred_check
      _
    $region3: #{tpu_custom_call.1} parent=1 // pred_check_branch
      %18 = sbr.rel (0) target = $region5
    $region4: #{tpu_custom_call.1} parent=1 // pred_region
      _
    $region5: #{tpu_custom_call.1} parent=1 // pred_fallthru
      _
    // Predicated region
    $region6: #{tpu_custom_call.1} parent=1 // pred_check
      _
    $region7: #{tpu_custom_call.1} parent=1 // pred_check_branch
      %20 = sbr.rel (0) target = $region9
    $region8: #{tpu_custom_call.1} parent=1 // pred_region
      _
    $region9: #{tpu_custom_call.1} parent=1 // pred_fallthru
      _
    // Predicated region
    $region10: #{tpu_custom_call.1} parent=1 // pred_check
      _
    $region11: #{tpu_custom_call.1} parent=1 // pred_check_branch
      %22 = sbr.rel (0) target = $region13
    $region12: #{tpu_custom_call.1} parent=1 // pred_region
      _
    $region13: #{tpu_custom_call.1} parent=1 // pred_fallthru
      _
    // Predicated region
    $region14: #{tpu_custom_call.1} parent=1 // pred_check
      _
    $region15: #{tpu_custom_call.1} parent=1 // pred_check_branch
      %24 = sbr.rel (0) target = $region17
    $region16: #{tpu_custom_call.1} parent=1 // pred_region
      _
    $region17: #{tpu_custom_call.1} parent=1 // pred_fallthru
      _
    // Predicated region
    $region18: #{tpu_custom_call.1} parent=1 // pred_check
      _
    $region19: #{tpu_custom_call.1} parent=1 // pred_check_branch
      %26 = sbr.rel (0) target = $region21
    $region20: #{tpu_custom_call.1} parent=1 // pred_region
      _
    $region21: #{tpu_custom_call.1} parent=1 // pred_fallthru
      _
    // Predicated region
    $region22: #{tpu_custom_call.1} parent=1 // pred_check
      _
    $region23: #{tpu_custom_call.1} parent=1 // pred_check_branch
      %28 = sbr.rel (0) target = $region25
    $region24: #{tpu_custom_call.1} parent=1 // pred_region
      _
    $region25: #{tpu_custom_call.1} parent=1 // pred_fallthru
      _
    // Predicated region
    $region26: #{tpu_custom_call.1} parent=1 // pred_check
      _
    $region27: #{tpu_custom_call.1} parent=1 // pred_check_branch
      %30 = sbr.rel (0) target = $region29
    $region28: #{tpu_custom_call.1} parent=1 // pred_region
      _
    $region29: #{tpu_custom_call.1} parent=1 // pred_fallthru
      _
    // Predicated region
    $region30: #{tpu_custom_call.1} parent=1 // pred_check
      _
    $region31: #{tpu_custom_call.1} parent=1 // pred_check_branch
      %32 = sbr.rel (0) target = $region33
    $region32: #{tpu_custom_call.1} parent=1 // pred_region
      _
    $region33: #{tpu_custom_call.1} parent=1 // pred_fallthru
      _
    // Predicated region
    $region34: #{tpu_custom_call.1} parent=1 // pred_check
      _
    $region35: #{tpu_custom_call.1} parent=1 // pred_check_branch
      %34 = sbr.rel (0) target = $region37
    $region36: #{tpu_custom_call.1} parent=1 // pred_region
      _
    $region37: #{tpu_custom_call.1} parent=1 // pred_fallthru
      _
    %v35 = vld [vmem:[%s2] sm:$0xff]
    %v36 = vld [vmem:[%s2 + $0x8] sm:$0xff]
    %v37 = vld [vmem:[%s2 + $0x10] sm:$0xff]
    %v38 = vld [vmem:[%s2 + $0x18] sm:$0xff]
    %v39 = vld [vmem:[%s0] sm:$0xff]
    %v40 = vld [vmem:[%s3] sm:$0xff]
    %v41 = vld [vmem:[%s3 + $0x8] sm:$0xff]
    %v42 = vld [vmem:[%s3 + $0x10] sm:$0xff]
    %v43 = vld [vmem:[%s3 + $0x18] sm:$0xff]
    %v44 = vld [vmem:[%s1] sm:$0xf]
    %vm45 = vcmask 31744
    %v47 = vsel %vm45, %v40, 0
    %v50 = vsel %vm45, %v41, 0
    %v53 = vsel %vm45, %v42, 0
    %v56 = vsel %vm45, %v43, 0
    %vm58 = vcmask 1043456
    %v60 = vsel %vm58, %v44, 0
    %62 = vmatprep.subr.mxu0 0.0
    %63 = vmatpush1.msra.mxu0 %v60
    %64 = vmatprep.subr.mxu0 0.0
    %65 = vmatpush1.msra.mxu0 0.0
    %66 = vmatprep.subr.mxu0 0.0
    %67 = vmatpush1.msra.mxu0 0.0
    %68 = vmatprep.subr.mxu0 0.0
    %69 = vmatpush1.msra.mxu0 0.0
    %70 = vmatprep.subr.mxu0 0.0
    %71 = vmatpush1.msra.mxu0 0.0
    %72 = vmatprep.subr.mxu0 0.0
    %73 = vmatpush1.msra.mxu0 0.0
    %74 = vmatprep.subr.mxu0 0.0
    %75 = vmatpush1.msra.mxu0 0.0
    %76 = vmatprep.subr.mxu0 0.0
    %77 = vmatpush1.msra.mxu0 0.0
    %78 = vmatprep.subr.mxu0 0.0
    %79 = vmatpush1.msra.mxu0 0.0
    %80 = vmatprep.subr.mxu0 0.0
    %81 = vmatpush1.msra.mxu0 0.0
    %82 = vmatprep.subr.mxu0 0.0
    %83 = vmatpush1.msra.mxu0 0.0
    %84 = vmatprep.subr.mxu0 0.0
    %85 = vmatpush1.msra.mxu0 0.0
    %86 = vmatprep.subr.mxu0 0.0
    %87 = vmatpush1.msra.mxu0 0.0
    %88 = vmatprep.subr.mxu0 0.0
    %89 = vmatpush1.msra.mxu0 0.0
    %90 = vmatprep.subr.mxu0 0.0
    %91 = vmatpush1.msra.mxu0 0.0
    %92 = vmatprep.subr.mxu0 0.0
    %93 = vmatpush1.msra.mxu0 0.0
    %94 = vmatprep.subr.mxu0 0.0
    %95 = vmatpush1.msra.mxu0 0.0
    %96 = vmatprep.subr.mxu0 0.0
    %97 = vmatpush1.msra.mxu0 0.0
    %98 = vmatprep.subr.mxu0 0.0
    %99 = vmatpush1.msra.mxu0 0.0
    %100 = vmatprep.subr.mxu0 0.0
    %101 = vmatpush1.msra.mxu0 0.0
    %102 = vmatprep.subr.mxu0 0.0
    %103 = vmatpush1.msra.mxu0 0.0
    %104 = vmatprep.subr.mxu0 0.0
    %105 = vmatpush1.msra.mxu0 0.0
    %106 = vmatprep.subr.mxu0 0.0
    %107 = vmatpush1.msra.mxu0 0.0
    %108 = vmatprep.subr.mxu0 0.0
    %109 = vmatpush1.msra.mxu0 0.0
    %110 = vmatprep.subr.mxu0 0.0
    %111 = vmatpush1.msra.mxu0 0.0
    %112 = vmatprep.subr.mxu0 0.0
    %113 = vmatpush1.msra.mxu0 0.0
    %114 = vmatprep.subr.mxu0 0.0
    %115 = vmatpush1.msra.mxu0 0.0
    %116 = vmatprep.subr.mxu0 0.0
    %117 = vmatpush1.msra.mxu0 0.0
    %118 = vmatprep.subr.mxu0 0.0
    %119 = vmatpush1.msra.mxu0 0.0
    %120 = vmatprep.subr.mxu0 0.0
    %121 = vmatpush1.msra.mxu0 0.0
    %122 = vmatprep.subr.mxu0 0.0
    %123 = vmatpush1.msra.mxu0 0.0
    %124 = vmatprep.subr.mxu0 0.0
    %125 = vmatpush1.msra.mxu0 0.0
    %126 = vmatprep.mubr.f32.mxu0 0.0
    %127 = vmatmul.mubr.f32.gmra.mrb[0].mxu0 %v47
    %v128 = vpop.f32.mrb[0].mxu0
    %v129 = vadd.f32 0.0, %v128
    %v130 = vpop.f32.mrb[0].mxu0
    %131 = vmatprep.mubr.f32.mxu0 0.0
    %132 = vmatmul.mubr.f32.gmra.mrb[0].mxu0 %v50
    %v133 = vpop.f32.mrb[0].mxu0
    %v134 = vadd.f32 0.0, %v133
    %v135 = vpop.f32.mrb[0].mxu0
    %136 = vmatprep.mubr.f32.mxu0 0.0
    %137 = vmatmul.mubr.f32.gmra.mrb[0].mxu0 %v53
    %v138 = vpop.f32.mrb[0].mxu0
    %v139 = vadd.f32 0.0, %v138
    %v140 = vpop.f32.mrb[0].mxu0
    %141 = vmatprep.mubr.f32.mxu0 0.0
    %142 = vmatmul.mubr.f32.gmra.mrb[0].mxu0 %v56
    %v143 = vpop.f32.mrb[0].mxu0
    %v144 = vadd.f32 0.0, %v143
    %v145 = vpop.f32.mrb[0].mxu0
    %146 = vdwg.mxu0
    %vm147 = vcmask 64512
    %v149 = vsel %vm147, %v35, 0
    %v152 = vsel %vm147, %v36, 0
    %v155 = vsel %vm147, %v37, 0
    %v158 = vsel %vm147, %v38, 0
    %160 = vmatprep.subr.mxu0 0.0
    %161 = vmatpush1.msra.mxu0 %v39
    %162 = vmatprep.subr.mxu0 0.0
    %163 = vmatpush1.msra.mxu0 0.0
    %164 = vmatprep.subr.mxu0 0.0
    %165 = vmatpush1.msra.mxu0 0.0
    %166 = vmatprep.subr.mxu0 0.0
    %167 = vmatpush1.msra.mxu0 0.0
    %168 = vmatprep.subr.mxu0 0.0
    %169 = vmatpush1.msra.mxu0 0.0
    %170 = vmatprep.subr.mxu0 0.0
    %171 = vmatpush1.msra.mxu0 0.0
    %172 = vmatprep.subr.mxu0 0.0
    %173 = vmatpush1.msra.mxu0 0.0
    %174 = vmatprep.subr.mxu0 0.0
    %175 = vmatpush1.msra.mxu0 0.0
    %176 = vmatprep.subr.mxu0 0.0
    %177 = vmatpush1.msra.mxu0 0.0
    %178 = vmatprep.subr.mxu0 0.0
    %179 = vmatpush1.msra.mxu0 0.0
    %180 = vmatprep.subr.mxu0 0.0
    %181 = vmatpush1.msra.mxu0 0.0
    %182 = vmatprep.subr.mxu0 0.0
    %183 = vmatpush1.msra.mxu0 0.0
    %184 = vmatprep.subr.mxu0 0.0
    %185 = vmatpush1.msra.mxu0 0.0
    %186 = vmatprep.subr.mxu0 0.0
    %187 = vmatpush1.msra.mxu0 0.0
    %188 = vmatprep.subr.mxu0 0.0
    %189 = vmatpush1.msra.mxu0 0.0
    %190 = vmatprep.subr.mxu0 0.0
    %191 = vmatpush1.msra.mxu0 0.0
    %192 = vmatprep.subr.mxu0 0.0
    %193 = vmatpush1.msra.mxu0 0.0
    %194 = vmatprep.subr.mxu0 0.0
    %195 = vmatpush1.msra.mxu0 0.0
    %196 = vmatprep.subr.mxu0 0.0
    %197 = vmatpush1.msra.mxu0 0.0
    %198 = vmatprep.subr.mxu0 0.0
    %199 = vmatpush1.msra.mxu0 0.0
    %200 = vmatprep.subr.mxu0 0.0
    %201 = vmatpush1.msra.mxu0 0.0
    %202 = vmatprep.subr.mxu0 0.0
    %203 = vmatpush1.msra.mxu0 0.0
    %204 = vmatprep.subr.mxu0 0.0
    %205 = vmatpush1.msra.mxu0 0.0
    %206 = vmatprep.subr.mxu0 0.0
    %207 = vmatpush1.msra.mxu0 0.0
    %208 = vmatprep.subr.mxu0 0.0
    %209 = vmatpush1.msra.mxu0 0.0
    %210 = vmatprep.subr.mxu0 0.0
    %211 = vmatpush1.msra.mxu0 0.0
    %212 = vmatprep.subr.mxu0 0.0
    %213 = vmatpush1.msra.mxu0 0.0
    %214 = vmatprep.subr.mxu0 0.0
    %215 = vmatpush1.msra.mxu0 0.0
    %216 = vmatprep.subr.mxu0 0.0
    %217 = vmatpush1.msra.mxu0 0.0
    %218 = vmatprep.subr.mxu0 0.0
    %219 = vmatpush1.msra.mxu0 0.0
    %220 = vmatprep.subr.mxu0 0.0
    %221 = vmatpush1.msra.mxu0 0.0
    %222 = vmatprep.subr.mxu0 0.0
    %223 = vmatpush1.msra.mxu0 0.0
    %224 = vmatprep.mubr.f32.mxu0 0.0
    %225 = vmatmul.mubr.f32.gmra.mrb[0].mxu0 %v149
    %v226 = vpop.f32.mrb[0].mxu0
    %v227 = vadd.f32 %v129, %v226
    %v228 = vpop.f32.mrb[0].mxu0
    %229 = vmatprep.mubr.f32.mxu0 0.0
    %230 = vmatmul.mubr.f32.gmra.mrb[0].mxu0 %v152
    %v231 = vpop.f32.mrb[0].mxu0
    %v232 = vadd.f32 %v134, %v231
    %v233 = vpop.f32.mrb[0].mxu0
    %234 = vmatprep.mubr.f32.mxu0 0.0
    %235 = vmatmul.mubr.f32.gmra.mrb[0].mxu0 %v155
    %v236 = vpop.f32.mrb[0].mxu0
    %v237 = vadd.f32 %v139, %v236
    %v238 = vpop.f32.mrb[0].mxu0
    %239 = vmatprep.mubr.f32.mxu0 0.0
    %240 = vmatmul.mubr.f32.gmra.mrb[0].mxu0 %v158
    %v241 = vpop.f32.mrb[0].mxu0
    %v242 = vadd.f32 %v144, %v241
    %v243 = vpop.f32.mrb[0].mxu0
    %244 = vdwg.mxu0
    %v245 = vld [vmem:[%s4] sm:$0xff]
    %v246 = vld [vmem:[%s4 + $0x8] sm:$0xff]
    %v247 = vld [vmem:[%s4 + $0x10] sm:$0xff]
    %v248 = vld [vmem:[%s4 + $0x18] sm:$0xff]
    %250 = vset.pattern.permute.xlu0 0
    %251 = vperm.xlu0 %250, %v245
    %v252 = vpop.permute.xlu0 %251
    %255 = vset.pattern.permute.xlu0 0
    %256 = vperm.xlu0 %255, %v246
    %v257 = vpop.permute.xlu0 %256
    %260 = vset.pattern.permute.xlu0 0
    %261 = vperm.xlu0 %260, %v247
    %v262 = vpop.permute.xlu0 %261
    %265 = vset.pattern.permute.xlu0 0
    %266 = vperm.xlu0 %265, %v248
    %v267 = vpop.permute.xlu0 %266
    %v269 = vadd.f32 %v227, %v252
    %v270 = vadd.f32 %v232, %v257
    %v271 = vadd.f32 %v237, %v262
    %v272 = vadd.f32 %v242, %v267
    %v273 = vmax.f32 %v269, 0.0
    %v274 = vmax.f32 %v270, 0.0
    %v275 = vmax.f32 %v271, 0.0
    %v276 = vmax.f32 %v272, 0.0
    %v277 = vld [vmem:[%s5] sm:$0xff]
    %v278 = vld [vmem:[%s5 + $0x8] sm:$0xff]
    %v279 = vld [vmem:[%s5 + $0x10] sm:$0xff]
    %v280 = vld [vmem:[%s5 + $0x18] sm:$0xff]
    %v281 = vld [vmem:[%s6] sm:$0xff]
    %v282 = vld [vmem:[%s6 + $0x8] sm:$0xff]
    %v283 = vld [vmem:[%s6 + $0x10] sm:$0xff]
    %v284 = vld [vmem:[%s6 + $0x18] sm:$0xff]
    %286 = vset.pattern.permute.xlu0 0
    %287 = vperm.xlu0 %286, %v281
    %v288 = vpop.permute.xlu0 %287
    %291 = vset.pattern.permute.xlu0 0
    %292 = vperm.xlu0 %291, %v282
    %v293 = vpop.permute.xlu0 %292
    %296 = vset.pattern.permute.xlu0 0
    %297 = vperm.xlu0 %296, %v283
    %v298 = vpop.permute.xlu0 %297
    %301 = vset.pattern.permute.xlu0 0
    %302 = vperm.xlu0 %301, %v284
    %v303 = vpop.permute.xlu0 %302
    %vm305 = vcmask 261120
    %v307 = vsel %vm305, %v277, 0
    %v310 = vsel %vm305, %v278, 0
    %v313 = vsel %vm305, %v279, 0
    %v316 = vsel %vm305, %v280, 0
    %318 = vmatprep.subr.mxu0 0.0
    %319 = vmatpush1.msra.mxu0 %v273
    %320 = vmatprep.subr.mxu0 0.0
    %321 = vmatpush1.msra.mxu0 %v274
    %322 = vmatprep.subr.mxu0 0.0
    %323 = vmatpush1.msra.mxu0 %v275
    %324 = vmatprep.subr.mxu0 0.0
    %325 = vmatpush1.msra.mxu0 %v276
    %326 = vmatprep.subr.mxu0 0.0
    %327 = vmatpush1.msra.mxu0 0.0
    %328 = vmatprep.subr.mxu0 0.0
    %329 = vmatpush1.msra.mxu0 0.0
    %330 = vmatprep.subr.mxu0 0.0
    %331 = vmatpush1.msra.mxu0 0.0
    %332 = vmatprep.subr.mxu0 0.0
    %333 = vmatpush1.msra.mxu0 0.0
    %334 = vmatprep.subr.mxu0 0.0
    %335 = vmatpush1.msra.mxu0 0.0
    %336 = vmatprep.subr.mxu0 0.0
    %337 = vmatpush1.msra.mxu0 0.0
    %338 = vmatprep.subr.mxu0 0.0
    %339 = vmatpush1.msra.mxu0 0.0
    %340 = vmatprep.subr.mxu0 0.0
    %341 = vmatpush1.msra.mxu0 0.0
    %342 = vmatprep.subr.mxu0 0.0
    %343 = vmatpush1.msra.mxu0 0.0
    %344 = vmatprep.subr.mxu0 0.0
    %345 = vmatpush1.msra.mxu0 0.0
    %346 = vmatprep.subr.mxu0 0.0
    %347 = vmatpush1.msra.mxu0 0.0
    %348 = vmatprep.subr.mxu0 0.0
    %349 = vmatpush1.msra.mxu0 0.0
    %350 = vmatprep.subr.mxu0 0.0
    %351 = vmatpush1.msra.mxu0 0.0
    %352 = vmatprep.subr.mxu0 0.0
    %353 = vmatpush1.msra.mxu0 0.0
    %354 = vmatprep.subr.mxu0 0.0
    %355 = vmatpush1.msra.mxu0 0.0
    %356 = vmatprep.subr.mxu0 0.0
    %357 = vmatpush1.msra.mxu0 0.0
    %358 = vmatprep.subr.mxu0 0.0
    %359 = vmatpush1.msra.mxu0 0.0
    %360 = vmatprep.subr.mxu0 0.0
    %361 = vmatpush1.msra.mxu0 0.0
    %362 = vmatprep.subr.mxu0 0.0
    %363 = vmatpush1.msra.mxu0 0.0
    %364 = vmatprep.subr.mxu0 0.0
    %365 = vmatpush1.msra.mxu0 0.0
    %366 = vmatprep.subr.mxu0 0.0
    %367 = vmatpush1.msra.mxu0 0.0
    %368 = vmatprep.subr.mxu0 0.0
    %369 = vmatpush1.msra.mxu0 0.0
    %370 = vmatprep.subr.mxu0 0.0
    %371 = vmatpush1.msra.mxu0 0.0
    %372 = vmatprep.subr.mxu0 0.0
    %373 = vmatpush1.msra.mxu0 0.0
    %374 = vmatprep.subr.mxu0 0.0
    %375 = vmatpush1.msra.mxu0 0.0
    %376 = vmatprep.subr.mxu0 0.0
    %377 = vmatpush1.msra.mxu0 0.0
    %378 = vmatprep.subr.mxu0 0.0
    %379 = vmatpush1.msra.mxu0 0.0
    %380 = vmatprep.subr.mxu0 0.0
    %381 = vmatpush1.msra.mxu0 0.0
    %382 = vmatprep.mubr.f32.mxu0 0.0
    %383 = vmatmul.mubr.f32.gmra.mrb[0].mxu0 %v307
    %v384 = vpop.f32.mrb[0].mxu0
    %v385 = vadd.f32 %v288, %v384
    %v386 = vpop.f32.mrb[0].mxu0
    %387 = vmatprep.mubr.f32.mxu0 0.0
    %388 = vmatmul.mubr.f32.gmra.mrb[0].mxu0 %v310
    %v389 = vpop.f32.mrb[0].mxu0
    %v390 = vadd.f32 %v293, %v389
    %v391 = vpop.f32.mrb[0].mxu0
    %392 = vmatprep.mubr.f32.mxu0 0.0
    %393 = vmatmul.mubr.f32.gmra.mrb[0].mxu0 %v313
    %v394 = vpop.f32.mrb[0].mxu0
    %v395 = vadd.f32 %v298, %v394
    %v396 = vpop.f32.mrb[0].mxu0
    %397 = vmatprep.mubr.f32.mxu0 0.0
    %398 = vmatmul.mubr.f32.gmra.mrb[0].mxu0 %v316
    %v399 = vpop.f32.mrb[0].mxu0
    %v400 = vadd.f32 %v303, %v399
    %v401 = vpop.f32.mrb[0].mxu0
    %402 = vdwg.mxu0
    %v403 = vmax.f32 %v385, 0.0
    %v404 = vmax.f32 %v390, 0.0
    %v405 = vmax.f32 %v395, 0.0
    %v406 = vmax.f32 %v400, 0.0
    %v407 = vld [vmem:[%s7] sm:$0xff]
    %v408 = vld [vmem:[%s7 + $0x8] sm:$0xff]
    %v409 = vld [vmem:[%s7 + $0x10] sm:$0xff]
    %v410 = vld [vmem:[%s7 + $0x18] sm:$0xff]
    %412 = vset.pattern.permute.xlu0 0
    %413 = vperm.xlu0 %412, %v407
    %v414 = vpop.permute.xlu0 %413
    %417 = vset.pattern.permute.xlu0 0
    %418 = vperm.xlu0 %417, %v408
    %v419 = vpop.permute.xlu0 %418
    %422 = vset.pattern.permute.xlu0 0
    %423 = vperm.xlu0 %422, %v409
    %v424 = vpop.permute.xlu0 %423
    %427 = vset.pattern.permute.xlu0 0
    %428 = vperm.xlu0 %427, %v410
    %v429 = vpop.permute.xlu0 %428
    %v431 = vmul.f32 %v403, %v414
    %v432 = vmul.f32 %v404, %v419
    %v433 = vmul.f32 %v405, %v424
    %v434 = vmul.f32 %v406, %v429
    %v435 = vsel %vm147, %v431, 0.0
    %v436 = vsel %vm147, %v432, 0.0
    %v437 = vadd.f32 %v435, %v436
    %v438 = vsel %vm147, %v433, 0.0
    %v439 = vadd.f32 %v437, %v438
    %v440 = vsel %vm147, %v434, 0.0
    %v441 = vadd.f32 %v439, %v440
    %v442 = vrot.slane %v441, 4
    %v443 = vadd.f32 %v441, %v442
    %v444 = vrot.slane %v443, 2
    %v445 = vadd.f32 %v443, %v444
    %v446 = vrot.slane %v445, 1
    %v447 = vadd.f32 %v445, %v446
    %v448 = vld [vmem:[#allocation2] sm:$0x1]
    %450 = vset.pattern.permute.xlu0 0
    %451 = vperm.xlu0 %450, %v448
    %v452 = vpop.permute.xlu0 %451
    %v454 = vlaneseq
    %v455 = vshrl.u32 %v454, 7
    %v456 = vsub.s32 0, %v455
    %v457 = vrot.slane %v452, %v456
    %v458 = vadd.f32 %v447, %v457
    %vm459 = vcmask 57344
    %460 = vst.msk [vmem:[#allocation3] sm:$0x1] %vm459, %v458
    // Predicated region
    $region38: #{tpu_custom_call.1} parent=1 // pred_check
      _
    $region39: #{tpu_custom_call.1} parent=1 // pred_check_branch
      %462 = sbr.rel (0) target = $region41
    $region40: #{tpu_custom_call.1} parent=1 // pred_region
      %s464 = ssub.s32 16, 16
      %465 = vsyncadd [#allocation4], %s464
      %s467 = sshll.u32 [#allocation3], 4
      %s468 = int_to_ptr.vmem [resolvable:$true] %s467
      %470 = dma.vmem_to_hbm [thread:$0]  %s468, 16, %s9, [#allocation4]
    $region41: #{tpu_custom_call.1} parent=1 // pred_fallthru
      _
    // Predicated region
    $region42: #{tpu_custom_call.1} parent=1 // pred_check
      _
    $region43: #{tpu_custom_call.1} parent=1 // pred_check_branch
      %472 = sbr.rel (0) target = $region45
    $region44: #{tpu_custom_call.1} parent=1 // pred_region
      %473 = dma.done [#allocation4], 16
    $region45: #{tpu_custom_call.1} parent=1 // pred_fallthru
      _
    %474 = vsyncpa [#allocation4], 1

</llo_original>
